<compile_context>
chip_gen: v6e
topology: v6e:2x2x1
jax: 0.10.0
libtpu: 0.0.40
codegen_flags: <defaults>
</compile_context>

<pallas_src>
import jax
import jax.numpy as jnp
from jax import lax
from jax.experimental import pallas as pl
from jax.experimental.pallas import tpu as pltpu

# ----------------- small synthetic config -----------------
B      = 2
T_VIS  = 16            # raw video frames
C_VIS  = 16            # raw visual feature dim
POOL   = 2             # AvgPool1d kernel == stride
T_V    = T_VIS // POOL # pooled video length (8)
L_TXT  = 8             # text length
C_TXT  = 16            # word-embedding dim (== C_VIS so both share one projection slab)
H      = 32            # hidden size
FFN    = 64            # feed-forward size
VOCAB  = 24            # vocab size for logits_text
L_SEQ  = L_TXT + T_V   # fused per-batch sequence length (16)
SEQ    = B * L_SEQ     # batch-folded sequence rows (32)
ROWS_IN = 2 * SEQ      # activation-slab rows: [text+even frames | odd frames] (64)
LANES  = 128

assert C_TXT == C_VIS and POOL == 2

# activation slab column map (single bf16 [ROWS_IN, 128] input)
COL_PROJ  = 0          # cols [0, C_VIS): projection-input features
COL_WMASK = 16         # word-mask indicator (text rows of the fused sequence)
COL_ISVIS = 17         # 1.0 on video rows of the fused sequence
COL_AMASK = 32         # cols [32, 32+SEQ): block-diag & key-valid attention mask

# weight slab row map (single bf16 [W_ROWS, 128] input)
W_PROJ_OFF, W_PROJ_ROWS = 0, 128   # [128, 2H]  = [frame_w | wt], rows >= C_VIS zero
W_QKV_OFF  = 128                   # [H, 3H]
W_FF1_OFF  = 160                   # [H, FFN]
W_FF2_OFF  = 192                   # [FFN, H]
W_HEAD_OFF = 256                   # [H, H+VOCAB] = [wiou | wvoc]
W_ROWS     = 288

# bias slab row map (single f32 [8, 128] input)
B_FRAME, B_MEMB, B_FF1, B_FF2, B_HEAD = 0, 1, 2, 3, 4

OUT_ROWS = B * L_TXT + B * T_V     # packed output rows (32)


# ----------------- fused WLML kernel -----------------
def _wlml_kernel(act_ref, w_ref, b_ref, out_ref):
    f32, bf16 = jnp.float32, jnp.bfloat16

    act = act_ref[...]                                                     # [64, 128] bf16

    # ---- fused frame Conv1d(k=1) + text projection: one MXU op over the whole slab.
    # Weight rows >= C_VIS are zero, so the mask columns of the slab contribute nothing.
    proj = jnp.dot(act, w_ref[W_PROJ_OFF:W_PROJ_OFF + W_PROJ_ROWS, 0:2 * H],
                   preferred_element_type=f32)                             # [64, 2H]
    frame_h = jnp.maximum(proj[:, 0:H] + b_ref[B_FRAME:B_FRAME + 1, 0:H], 0.0)   # [64, H]
    text_h = proj[0:SEQ, H:2 * H]                                          # [32, H]

    # AvgPool1d(POOL, POOL): even frames live in rows [0, SEQ), odd frames in [SEQ, 2*SEQ)
    # (wrapper layout), so pooling is a plain VPU add of the two row halves.
    vis_h = (frame_h[0:SEQ] + frame_h[SEQ:2 * SEQ]) * (1.0 / POOL)         # [32, H]

    wmask = act[0:SEQ, COL_WMASK:COL_WMASK + 1]                            # [32, 1]
    is_vis = act[0:SEQ, COL_ISVIS:COL_ISVIS + 1]                           # [32, 1]
    memb = b_ref[B_MEMB:B_MEMB + 1, 0:H]                                   # [1, H]

    te = jnp.where(wmask > 0, memb, text_h)        # learned [MASK] embedding substitution
    x = jnp.where(is_vis > 0, vis_h, te)           # fused text/video sequence [32, H] f32

    # ---- single-head self-attention over the batch-folded sequence
    amask = act[0:SEQ, COL_AMASK:COL_AMASK + SEQ]                          # [32, 32]
    xb = x.astype(bf16)
    qkv = jnp.dot(xb, w_ref[W_QKV_OFF:W_QKV_OFF + H, 0:3 * H],
                  preferred_element_type=f32).astype(bf16)                 # [32, 3H]
    q, k, v = qkv[:, 0:H], qkv[:, H:2 * H], qkv[:, 2 * H:3 * H]
    s = lax.dot_general(q, k, dimension_numbers=(((1,), (1,)), ((), ())),
                        preferred_element_type=f32) * (1.0 / (H ** 0.5))   # [32, 32]
    s = jnp.where(amask > 0, s, -1e9)
    p = jnp.exp(s - jnp.max(s, axis=-1, keepdims=True))
    a = (p / jnp.sum(p, axis=-1, keepdims=True)).astype(bf16)
    ctx = jnp.dot(a, v, preferred_element_type=f32)                        # [32, H]

    # ---- residual + FFN
    # TODO(synk): the reference bert_layer is config-defined; a real VL-BERT block also has a
    # W_o output projection and two LayerNorms -- this simplified 1-layer/1-head block stands in.
    hdd = x + ctx
    ffh = jnp.maximum(
        jnp.dot(hdd.astype(bf16), w_ref[W_FF1_OFF:W_FF1_OFF + H, 0:FFN],
                preferred_element_type=f32) + b_ref[B_FF1:B_FF1 + 1, 0:FFN], 0.0)
    ff = jnp.dot(ffh.astype(bf16), w_ref[W_FF2_OFF:W_FF2_OFF + FFN, 0:H],
                 preferred_element_type=f32) + b_ref[B_FF2:B_FF2 + 1, 0:H]
    fused = hdd + ff                                                       # [32, H]
    fused_bf = fused.astype(bf16)

    # ---- output heads, fused weight [wiou | wvoc]
    ho = jnp.dot(fused_bf, w_ref[W_HEAD_OFF:W_HEAD_OFF + H, 0:H + VOCAB],
                 preferred_element_type=f32) + b_ref[B_HEAD:B_HEAD + 1, 0:H + VOCAB]

    # ---- sublane-stacked, lane-0-aligned packed output (zero-init + sliced stores)
    out_ref[...] = jnp.zeros((OUT_ROWS, LANES), f32)
    for b in range(B):
        r0 = b * L_SEQ
        out_ref[b * L_TXT:(b + 1) * L_TXT, 0:VOCAB] = ho[r0:r0 + L_TXT, H:H + VOCAB]
        p_iou = ho[r0 + L_TXT:r0 + L_SEQ, 0:H].astype(bf16)                # [T_V, H]
        vd = fused_bf[r0 + L_TXT:r0 + L_SEQ]                               # [T_V, H]
        iou = lax.dot_general(p_iou, vd, dimension_numbers=(((1,), (1,)), ((), ())),
                              preferred_element_type=f32)                  # [T_V, T_V]
        out_ref[B * L_TXT + b * T_V:B * L_TXT + (b + 1) * T_V, 0:T_V] = iou


def wlml_fused_call(act, wslab, bslab):
    return pl.pallas_call(
        _wlml_kernel,
        out_shape=jax.ShapeDtypeStruct((OUT_ROWS, LANES), jnp.float32),
        grid=(1,),
        in_specs=[
            pl.BlockSpec((ROWS_IN, LANES), lambda i: (0, 0)),   # activation slab (bf16)
            pl.BlockSpec((W_ROWS, LANES), lambda i: (0, 0)),    # fused weight slab (bf16)
            pl.BlockSpec((8, LANES), lambda i: (0, 0)),         # fused bias slab (f32)
        ],
        out_specs=pl.BlockSpec((OUT_ROWS, LANES), lambda i: (0, 0)),
        compiler_params=pltpu.CompilerParams(dimension_semantics=("arbitrary",)),
    )(act, wslab, bslab)


# ----------------- parameter init (deterministic, synthetic) -----------------
def init_params(seed=1234):
    keys = jax.random.split(jax.random.PRNGKey(seed), 12)
    s = 0.1
    return dict(
        frame_w=s * jax.random.normal(keys[0], (C_VIS, H), jnp.float32),
        frame_b=s * jax.random.normal(keys[1], (1, H), jnp.float32),
        wt=s * jax.random.normal(keys[2], (C_TXT, H), jnp.float32),
        memb=s * jax.random.normal(keys[3], (1, H), jnp.float32),
        wq=s * jax.random.normal(keys[4], (H, H), jnp.float32),
        wk=s * jax.random.normal(keys[5], (H, H), jnp.float32),
        wv=s * jax.random.normal(keys[6], (H, H), jnp.float32),
        w1=s * jax.random.normal(keys[7], (H, FFN), jnp.float32),
        b1=jnp.zeros((1, FFN), jnp.float32),
        w2=s * jax.random.normal(keys[8], (FFN, H), jnp.float32),
        b2=jnp.zeros((1, H), jnp.float32),
        wvoc=s * jax.random.normal(keys[9], (H, VOCAB), jnp.float32),
        bvoc=jnp.zeros((1, VOCAB), jnp.float32),
        wiou=s * jax.random.normal(keys[10], (H, H), jnp.float32),
        biou=jnp.zeros((1, H), jnp.float32),
    )


def pack_params(p):
    """Pack all weights into one pre-padded bf16 slab and all biases into one f32 slab."""
    f32, bf16 = jnp.float32, jnp.bfloat16
    wslab = jnp.zeros((W_ROWS, LANES), f32)
    wslab = wslab.at[W_PROJ_OFF:W_PROJ_OFF + C_VIS, 0:2 * H].set(
        jnp.concatenate([p["frame_w"], p["wt"]], axis=1))
    wslab = wslab.at[W_QKV_OFF:W_QKV_OFF + H, 0:3 * H].set(
        jnp.concatenate([p["wq"], p["wk"], p["wv"]], axis=1))
    wslab = wslab.at[W_FF1_OFF:W_FF1_OFF + H, 0:FFN].set(p["w1"])
    wslab = wslab.at[W_FF2_OFF:W_FF2_OFF + FFN, 0:H].set(p["w2"])
    wslab = wslab.at[W_HEAD_OFF:W_HEAD_OFF + H, 0:H + VOCAB].set(
        jnp.concatenate([p["wiou"], p["wvoc"]], axis=1))

    bslab = jnp.zeros((8, LANES), f32)
    bslab = bslab.at[B_FRAME, 0:H].set(p["frame_b"][0])
    bslab = bslab.at[B_MEMB, 0:H].set(p["memb"][0])
    bslab = bslab.at[B_FF1, 0:FFN].set(p["b1"][0])
    bslab = bslab.at[B_FF2, 0:H].set(p["b2"][0])
    bslab = bslab.at[B_HEAD, 0:H].set(p["biou"][0])
    bslab = bslab.at[B_HEAD, H:H + VOCAB].set(p["bvoc"][0])
    return dict(wslab=wslab.astype(bf16), bslab=bslab)


# ----------------- wrapper-side activation slab (pure layout plumbing) -----------------
def build_act_slab(textual_input, textual_mask, word_mask, visual_input):
    f32 = jnp.float32
    vis = visual_input.reshape(B, T_V, POOL, C_VIS)
    vis_even, vis_odd = vis[:, :, 0, :], vis[:, :, 1, :]
    top = jnp.concatenate([textual_input, vis_even], axis=1).reshape(SEQ, C_VIS)
    bot = jnp.concatenate([jnp.zeros((B, L_TXT, C_VIS), f32), vis_odd],
                          axis=1).reshape(SEQ, C_VIS)

    wmask_rows = jnp.concatenate([word_mask.astype(f32), jnp.zeros((B, T_V), f32)],
                                 axis=1).reshape(SEQ, 1)
    isvis_rows = jnp.concatenate([jnp.zeros((B, L_TXT), f32), jnp.ones((B, T_V), f32)],
                                 axis=1).reshape(SEQ, 1)
    key_valid = jnp.concatenate([textual_mask.astype(f32), jnp.ones((B, T_V), f32)],
                                axis=1).reshape(SEQ)
    bidx = jnp.arange(SEQ) // L_SEQ
    amask = (bidx[:, None] == bidx[None, :]).astype(f32) * key_valid[None, :]   # block-diag

    act = jnp.zeros((ROWS_IN, LANES), f32)
    act = act.at[:, COL_PROJ:COL_PROJ + C_VIS].set(jnp.concatenate([top, bot], axis=0))
    act = act.at[0:SEQ, COL_WMASK:COL_WMASK + 1].set(wmask_rows)
    act = act.at[0:SEQ, COL_ISVIS:COL_ISVIS + 1].set(isvis_rows)
    act = act.at[0:SEQ, COL_AMASK:COL_AMASK + SEQ].set(amask)
    return act.astype(jnp.bfloat16)


# ----------------- full WLML forward -----------------
def wlml_forward(pw, textual_input, textual_mask, word_mask,
                 visual_input, video_score, video_label):
    f32 = jnp.float32
    act = build_act_slab(textual_input, textual_mask, word_mask, visual_input)
    packed = wlml_fused_call(act, pw["wslab"], pw["bslab"])                 # [32, 128]

    logits_text = packed[0:B * L_TXT, 0:VOCAB].reshape(B, L_TXT, VOCAB)
    logits_iou = packed[B * L_TXT:B * L_TXT + B * T_V, 0:T_V].reshape(B, T_V, T_V)

    # plain-JAX glue (cheap mask / pseudo-label logic)
    iou_mask_map = jnp.triu(jnp.ones((T_V, T_V), f32))
    # TODO(synk): exact pseudo-GT-time / is_single logic in LOC_PSE is config-dependent; this is
    # a simple score-threshold surrogate with matching shapes.
    thr = jnp.mean(video_score, axis=1, keepdims=True)
    above = (video_score >= thr).astype(f32)                                # [B, T_VIS]
    idx = jnp.arange(T_VIS, dtype=f32)[None, :]
    start = jnp.min(jnp.where(above > 0, idx, float(T_VIS - 1)), axis=1)
    end = jnp.max(jnp.where(above > 0, idx, 0.0), axis=1)
    gt_times = jnp.stack([start, end], axis=1) / float(T_VIS)               # [B, 2]
    is_single = (video_label == 1)                                          # [B] bool

    return logits_text, logits_iou, iou_mask_map, gt_times, is_single


if __name__ == "__main__":
    key = jax.random.PRNGKey(0)
    k1, k2, k3, k4 = jax.random.split(key, 4)

    textual_input = jax.random.normal(k1, (B, L_TXT, C_TXT), jnp.float32)
    textual_mask = jnp.ones((B, L_TXT), jnp.float32).at[1, -2:].set(0.0)
    word_mask = (jax.random.uniform(k2, (B, L_TXT)) < 0.25).astype(jnp.float32)
    visual_input = jax.random.normal(k3, (B, T_VIS, C_VIS), jnp.float32)
    video_score = jax.random.uniform(k4, (B, T_VIS), jnp.float32)
    video_label = jnp.array([1, 2], jnp.int32)

    params = init_params()
    packed_params = pack_params(params)

    outs = jax.jit(wlml_forward)(packed_params, textual_input, textual_mask, word_mask,
                                 visual_input, video_score, video_label)
    jax.block_until_ready(outs)

    logits_text, logits_iou, iou_mask_map, gt_times, is_single = outs
    assert logits_text.shape == (B, L_TXT, VOCAB)
    assert logits_iou.shape == (B, T_V, T_V)
    assert iou_mask_map.shape == (T_V, T_V)
    assert gt_times.shape == (B, 2)
    assert is_single.shape == (B,)
    assert bool(jnp.all(jnp.isfinite(logits_text))) and bool(jnp.all(jnp.isfinite(logits_iou)))
    print("KERNEL_OK")
</pallas_src>

<mosaic_0001>
module attributes {stable_mosaic.version = 11 : i64} {
  func.func @_wlml_kernel(%arg0: i32, %arg1: memref<64x128xbf16, #tpu.memory_space<vmem>>, %arg2: memref<288x128xbf16, #tpu.memory_space<vmem>>, %arg3: memref<8x128xf32, #tpu.memory_space<vmem>>, %arg4: memref<32x128xf32, #tpu.memory_space<vmem>>) attributes {dimension_semantics = [#tpu.dimension_semantics<arbitrary>], iteration_bounds = array<i64: 1>, scalar_prefetch = 0 : i64, scratch_operands = 0 : i64, tpu.core_type = #tpu.core_type<tc>, window_params = [{pipeline_mode = #tpu.pipeline_mode<synchronous>, transform_indices = @transform_0, window_bounds = array<i64: 64, 128>}, {pipeline_mode = #tpu.pipeline_mode<synchronous>, transform_indices = @transform_1, window_bounds = array<i64: 288, 128>}, {pipeline_mode = #tpu.pipeline_mode<synchronous>, transform_indices = @transform_2, window_bounds = array<i64: 8, 128>}, {pipeline_mode = #tpu.pipeline_mode<synchronous>, transform_indices = @transform_3, window_bounds = array<i64: 32, 128>}]} {
    %c0 = arith.constant 0 : index
    %c0_0 = arith.constant 0 : index
    %0 = vector.load %arg1[%c0, %c0_0] : memref<64x128xbf16, #tpu.memory_space<vmem>>, vector<64x128xbf16>
    %c0_1 = arith.constant 0 : index
    %c0_2 = arith.constant 0 : index
    %1 = vector.load %arg2[%c0_1, %c0_2] : memref<288x128xbf16, #tpu.memory_space<vmem>>, vector<128x64xbf16>
    %cst = arith.constant dense<0.000000e+00> : vector<64x64xf32>
    %2 = tpu.matmul %0, %1, %cst {dimension_numbers = #tpu.dot_dimension_numbers<[1], [0], [0], [1], [0, 0, 1, 1], [], []>} : vector<64x128xbf16>, vector<128x64xbf16>, vector<64x64xf32> -> vector<64x64xf32>
    %3 = vector.extract_strided_slice %2 {offsets = [0, 0], sizes = [64, 32], strides = [1, 1]} : vector<64x64xf32> to vector<64x32xf32>
    %c0_3 = arith.constant 0 : index
    %c0_4 = arith.constant 0 : index
    %4 = vector.load %arg3[%c0_3, %c0_4] : memref<8x128xf32, #tpu.memory_space<vmem>>, vector<1x32xf32>
    %5 = vector.broadcast %4 : vector<1x32xf32> to vector<64x32xf32>
    %6 = arith.addf %3, %5 : vector<64x32xf32>
    %cst_5 = arith.constant 0.000000e+00 : f32
    %7 = vector.broadcast %cst_5 : f32 to vector<64x32xf32>
    %8 = arith.maximumf %6, %7 : vector<64x32xf32>
    %9 = vector.extract_strided_slice %2 {offsets = [0, 32], sizes = [32, 32], strides = [1, 1]} : vector<64x64xf32> to vector<32x32xf32>
    %10 = vector.extract_strided_slice %8 {offsets = [0, 0], sizes = [32, 32], strides = [1, 1]} : vector<64x32xf32> to vector<32x32xf32>
    %11 = vector.extract_strided_slice %8 {offsets = [32, 0], sizes = [32, 32], strides = [1, 1]} : vector<64x32xf32> to vector<32x32xf32>
    %12 = arith.addf %10, %11 : vector<32x32xf32>
    %cst_6 = arith.constant 5.000000e-01 : f32
    %13 = vector.broadcast %cst_6 : f32 to vector<32x32xf32>
    %14 = arith.mulf %12, %13 : vector<32x32xf32>
    %15 = vector.extract_strided_slice %0 {offsets = [0, 16], sizes = [32, 1], strides = [1, 1]} : vector<64x128xbf16> to vector<32x1xbf16>
    %16 = vector.extract_strided_slice %0 {offsets = [0, 17], sizes = [32, 1], strides = [1, 1]} : vector<64x128xbf16> to vector<32x1xbf16>
    %c1 = arith.constant 1 : index
    %c0_7 = arith.constant 0 : index
    %17 = vector.load %arg3[%c1, %c0_7] : memref<8x128xf32, #tpu.memory_space<vmem>>, vector<1x32xf32>
    %cst_8 = arith.constant 0.000000e+00 : bf16
    %18 = vector.broadcast %cst_8 : bf16 to vector<32x1xbf16>
    %19 = arith.cmpf ogt, %15, %18 : vector<32x1xbf16>
    %20 = vector.shape_cast %19 : vector<32x1xi1> to vector<32x1xi1>
    %21 = vector.broadcast %20 : vector<32x1xi1> to vector<32x32xi1>
    %22 = vector.shape_cast %17 : vector<1x32xf32> to vector<1x32xf32>
    %23 = vector.broadcast %22 : vector<1x32xf32> to vector<32x32xf32>
    %24 = arith.select %21, %23, %9 : vector<32x32xi1>, vector<32x32xf32>
    %cst_9 = arith.constant 0.000000e+00 : bf16
    %25 = vector.broadcast %cst_9 : bf16 to vector<32x1xbf16>
    %26 = arith.cmpf ogt, %16, %25 : vector<32x1xbf16>
    %27 = vector.shape_cast %26 : vector<32x1xi1> to vector<32x1xi1>
    %28 = vector.broadcast %27 : vector<32x1xi1> to vector<32x32xi1>
    %29 = arith.select %28, %14, %24 : vector<32x32xi1>, vector<32x32xf32>
    %30 = vector.extract_strided_slice %0 {offsets = [0, 32], sizes = [32, 32], strides = [1, 1]} : vector<64x128xbf16> to vector<32x32xbf16>
    %31 = arith.truncf %29 : vector<32x32xf32> to vector<32x32xbf16>
    %c128 = arith.constant 128 : index
    %c0_10 = arith.constant 0 : index
    %32 = vector.load %arg2[%c128, %c0_10] : memref<288x128xbf16, #tpu.memory_space<vmem>>, vector<32x96xbf16>
    %cst_11 = arith.constant dense<0.000000e+00> : vector<32x96xf32>
    %33 = tpu.matmul %31, %32, %cst_11 {dimension_numbers = #tpu.dot_dimension_numbers<[1], [0], [0], [1], [0, 0, 1, 1], [], []>} : vector<32x32xbf16>, vector<32x96xbf16>, vector<32x96xf32> -> vector<32x96xf32>
    %34 = arith.truncf %33 : vector<32x96xf32> to vector<32x96xbf16>
    %35 = vector.extract_strided_slice %34 {offsets = [0, 0], sizes = [32, 32], strides = [1, 1]} : vector<32x96xbf16> to vector<32x32xbf16>
    %36 = vector.extract_strided_slice %34 {offsets = [0, 32], sizes = [32, 32], strides = [1, 1]} : vector<32x96xbf16> to vector<32x32xbf16>
    %37 = vector.extract_strided_slice %34 {offsets = [0, 64], sizes = [32, 32], strides = [1, 1]} : vector<32x96xbf16> to vector<32x32xbf16>
    %cst_12 = arith.constant dense<0.000000e+00> : vector<32x32xf32>
    %38 = tpu.matmul %35, %36, %cst_12 {dimension_numbers = #tpu.dot_dimension_numbers<[1], [1], [0], [0], [0, 0, 1, 0], [], []>} : vector<32x32xbf16>, vector<32x32xbf16>, vector<32x32xf32> -> vector<32x32xf32>
    %cst_13 = arith.constant 0.176776692 : f32
    %39 = vector.broadcast %cst_13 : f32 to vector<32x32xf32>
    %40 = arith.mulf %38, %39 : vector<32x32xf32>
    %cst_14 = arith.constant 0.000000e+00 : bf16
    %41 = vector.broadcast %cst_14 : bf16 to vector<32x32xbf16>
    %42 = arith.cmpf ogt, %30, %41 : vector<32x32xbf16>
    %cst_15 = arith.constant -1.000000e+09 : f32
    %43 = vector.broadcast %cst_15 : f32 to vector<32x32xf32>
    %44 = arith.select %42, %40, %43 : vector<32x32xi1>, vector<32x32xf32>
    %cst_16 = arith.constant dense<0xFF800000> : vector<32xf32>
    %45 = vector.multi_reduction <maximumf>, %44, %cst_16 [1] : vector<32x32xf32> to vector<32xf32>
    %46 = vector.shape_cast %45 : vector<32xf32> to vector<32x1xf32>
    %47 = vector.broadcast %46 : vector<32x1xf32> to vector<32x32xf32>
    %48 = arith.subf %44, %47 : vector<32x32xf32>
    %49 = math.exp %48 : vector<32x32xf32>
    %cst_17 = arith.constant dense<0.000000e+00> : vector<32xf32>
    %50 = vector.multi_reduction <add>, %49, %cst_17 [1] : vector<32x32xf32> to vector<32xf32>
    %51 = vector.shape_cast %50 : vector<32xf32> to vector<32x1xf32>
    %52 = vector.broadcast %51 : vector<32x1xf32> to vector<32x32xf32>
    %53 = arith.divf %49, %52 : vector<32x32xf32>
    %54 = arith.truncf %53 : vector<32x32xf32> to vector<32x32xbf16>
    %cst_18 = arith.constant dense<0.000000e+00> : vector<32x32xf32>
    %55 = tpu.matmul %54, %37, %cst_18 {dimension_numbers = #tpu.dot_dimension_numbers<[1], [0], [0], [1], [0, 0, 1, 1], [], []>} : vector<32x32xbf16>, vector<32x32xbf16>, vector<32x32xf32> -> vector<32x32xf32>
    %56 = arith.addf %29, %55 : vector<32x32xf32>
    %57 = arith.truncf %56 : vector<32x32xf32> to vector<32x32xbf16>
    %c160 = arith.constant 160 : index
    %c0_19 = arith.constant 0 : index
    %58 = vector.load %arg2[%c160, %c0_19] : memref<288x128xbf16, #tpu.memory_space<vmem>>, vector<32x64xbf16>
    %cst_20 = arith.constant dense<0.000000e+00> : vector<32x64xf32>
    %59 = tpu.matmul %57, %58, %cst_20 {dimension_numbers = #tpu.dot_dimension_numbers<[1], [0], [0], [1], [0, 0, 1, 1], [], []>} : vector<32x32xbf16>, vector<32x64xbf16>, vector<32x64xf32> -> vector<32x64xf32>
    %c2 = arith.constant 2 : index
    %c0_21 = arith.constant 0 : index
    %60 = vector.load %arg3[%c2, %c0_21] : memref<8x128xf32, #tpu.memory_space<vmem>>, vector<1x64xf32>
    %61 = vector.broadcast %60 : vector<1x64xf32> to vector<32x64xf32>
    %62 = arith.addf %59, %61 : vector<32x64xf32>
    %cst_22 = arith.constant 0.000000e+00 : f32
    %63 = vector.broadcast %cst_22 : f32 to vector<32x64xf32>
    %64 = arith.maximumf %62, %63 : vector<32x64xf32>
    %65 = arith.truncf %64 : vector<32x64xf32> to vector<32x64xbf16>
    %c192 = arith.constant 192 : index
    %c0_23 = arith.constant 0 : index
    %66 = vector.load %arg2[%c192, %c0_23] : memref<288x128xbf16, #tpu.memory_space<vmem>>, vector<64x32xbf16>
    %cst_24 = arith.constant dense<0.000000e+00> : vector<32x32xf32>
    %67 = tpu.matmul %65, %66, %cst_24 {dimension_numbers = #tpu.dot_dimension_numbers<[1], [0], [0], [1], [0, 0, 1, 1], [], []>} : vector<32x64xbf16>, vector<64x32xbf16>, vector<32x32xf32> -> vector<32x32xf32>
    %c3 = arith.constant 3 : index
    %c0_25 = arith.constant 0 : index
    %68 = vector.load %arg3[%c3, %c0_25] : memref<8x128xf32, #tpu.memory_space<vmem>>, vector<1x32xf32>
    %69 = vector.broadcast %68 : vector<1x32xf32> to vector<32x32xf32>
    %70 = arith.addf %67, %69 : vector<32x32xf32>
    %71 = arith.addf %56, %70 : vector<32x32xf32>
    %72 = arith.truncf %71 : vector<32x32xf32> to vector<32x32xbf16>
    %c256 = arith.constant 256 : index
    %c0_26 = arith.constant 0 : index
    %73 = vector.load %arg2[%c256, %c0_26] : memref<288x128xbf16, #tpu.memory_space<vmem>>, vector<32x56xbf16>
    %cst_27 = arith.constant dense<0.000000e+00> : vector<32x56xf32>
    %74 = tpu.matmul %72, %73, %cst_27 {dimension_numbers = #tpu.dot_dimension_numbers<[1], [0], [0], [1], [0, 0, 1, 1], [], []>} : vector<32x32xbf16>, vector<32x56xbf16>, vector<32x56xf32> -> vector<32x56xf32>
    %c4 = arith.constant 4 : index
    %c0_28 = arith.constant 0 : index
    %75 = vector.load %arg3[%c4, %c0_28] : memref<8x128xf32, #tpu.memory_space<vmem>>, vector<1x56xf32>
    %76 = vector.broadcast %75 : vector<1x56xf32> to vector<32x56xf32>
    %77 = arith.addf %74, %76 : vector<32x56xf32>
    %cst_29 = arith.constant 0.000000e+00 : f32
    %78 = vector.broadcast %cst_29 : f32 to vector<32x128xf32>
    %c0_30 = arith.constant 0 : index
    %c0_31 = arith.constant 0 : index
    %79 = vector.load %arg4[%c0_30, %c0_31] : memref<32x128xf32, #tpu.memory_space<vmem>>, vector<32x128xf32>
    tpu.vector_store %arg4[%c0_30, %c0_31], %78 {strides = array<i32>} : memref<32x128xf32, #tpu.memory_space<vmem>>, vector<32x128xf32>,
    %80 = vector.extract_strided_slice %77 {offsets = [0, 32], sizes = [8, 24], strides = [1, 1]} : vector<32x56xf32> to vector<8x24xf32>
    %c0_32 = arith.constant 0 : index
    %c0_33 = arith.constant 0 : index
    %81 = vector.load %arg4[%c0_32, %c0_33] : memref<32x128xf32, #tpu.memory_space<vmem>>, vector<8x24xf32>
    tpu.vector_store %arg4[%c0_32, %c0_33], %80 {strides = array<i32>} : memref<32x128xf32, #tpu.memory_space<vmem>>, vector<8x24xf32>,
    %82 = vector.extract_strided_slice %77 {offsets = [8, 0], sizes = [8, 32], strides = [1, 1]} : vector<32x56xf32> to vector<8x32xf32>
    %83 = arith.truncf %82 : vector<8x32xf32> to vector<8x32xbf16>
    %84 = vector.extract_strided_slice %72 {offsets = [8, 0], sizes = [8, 32], strides = [1, 1]} : vector<32x32xbf16> to vector<8x32xbf16>
    %cst_34 = arith.constant dense<0.000000e+00> : vector<8x8xf32>
    %85 = tpu.matmul %83, %84, %cst_34 {dimension_numbers = #tpu.dot_dimension_numbers<[1], [1], [0], [0], [0, 0, 1, 0], [], []>} : vector<8x32xbf16>, vector<8x32xbf16>, vector<8x8xf32> -> vector<8x8xf32>
    %c16 = arith.constant 16 : index
    %c0_35 = arith.constant 0 : index
    %86 = vector.load %arg4[%c16, %c0_35] : memref<32x128xf32, #tpu.memory_space<vmem>>, vector<8x8xf32>
    tpu.vector_store %arg4[%c16, %c0_35], %85 {strides = array<i32>} : memref<32x128xf32, #tpu.memory_space<vmem>>, vector<8x8xf32>,
    %87 = vector.extract_strided_slice %77 {offsets = [16, 32], sizes = [8, 24], strides = [1, 1]} : vector<32x56xf32> to vector<8x24xf32>
    %c8 = arith.constant 8 : index
    %c0_36 = arith.constant 0 : index
    %88 = vector.load %arg4[%c8, %c0_36] : memref<32x128xf32, #tpu.memory_space<vmem>>, vector<8x24xf32>
    tpu.vector_store %arg4[%c8, %c0_36], %87 {strides = array<i32>} : memref<32x128xf32, #tpu.memory_space<vmem>>, vector<8x24xf32>,
    %89 = vector.extract_strided_slice %77 {offsets = [24, 0], sizes = [8, 32], strides = [1, 1]} : vector<32x56xf32> to vector<8x32xf32>
    %90 = arith.truncf %89 : vector<8x32xf32> to vector<8x32xbf16>
    %91 = vector.extract_strided_slice %72 {offsets = [24, 0], sizes = [8, 32], strides = [1, 1]} : vector<32x32xbf16> to vector<8x32xbf16>
    %cst_37 = arith.constant dense<0.000000e+00> : vector<8x8xf32>
    %92 = tpu.matmul %90, %91, %cst_37 {dimension_numbers = #tpu.dot_dimension_numbers<[1], [1], [0], [0], [0, 0, 1, 0], [], []>} : vector<8x32xbf16>, vector<8x32xbf16>, vector<8x8xf32> -> vector<8x8xf32>
    %c24 = arith.constant 24 : index
    %c0_38 = arith.constant 0 : index
    %93 = vector.load %arg4[%c24, %c0_38] : memref<32x128xf32, #tpu.memory_space<vmem>>, vector<8x8xf32>
    tpu.vector_store %arg4[%c24, %c0_38], %92 {strides = array<i32>} : memref<32x128xf32, #tpu.memory_space<vmem>>, vector<8x8xf32>,
    return
  }
  func.func @transform_0(%arg0: i32) -> (i32, i32) {
    %c0_i32 = arith.constant 0 : i32
    %c0_i32_0 = arith.constant 0 : i32
    %c0_i32_1 = arith.constant 0 : i32
    return %c0_i32, %c0_i32_0 : i32, i32
  }
  func.func @transform_1(%arg0: i32) -> (i32, i32) {
    %c0_i32 = arith.constant 0 : i32
    %c0_i32_0 = arith.constant 0 : i32
    %c0_i32_1 = arith.constant 0 : i32
    return %c0_i32, %c0_i32_0 : i32, i32
  }
  func.func @transform_2(%arg0: i32) -> (i32, i32) {
    %c0_i32 = arith.constant 0 : i32
    %c0_i32_0 = arith.constant 0 : i32
    %c0_i32_1 = arith.constant 0 : i32
    return %c0_i32, %c0_i32_0 : i32, i32
  }
  func.func @transform_3(%arg0: i32) -> (i32, i32) {
    %c0_i32 = arith.constant 0 : i32
    %c0_i32_0 = arith.constant 0 : i32
    %c0_i32_1 = arith.constant 0 : i32
    return %c0_i32, %c0_i32_0 : i32, i32
  }
}

</mosaic_0001>

<llo_original>
// kernel: mul.5
$region0: #{mul.5}
  %s0 = inlined_call_operand.vmem [shape: bf16[2,16], index: 0, kind: input, shape index: {}]
  %s1 = inlined_call_operand.vmem [shape: bf16[32], index: 1, kind: output, shape index: {}]
  $region1: #{mul.5} parent=0
    #allocation0 [shape = 'u8[4096]{0}', space=vmem, size = 0x1000, scoped, tag = 'scoped mem for output reshape']
    #allocation1 [shape = 'u8[4096]{0}', space=vmem, size = 0x1000, scoped, tag = 'scoped mem for input reshape']
    %s3 = smul.u32 1, 2
    %s4 = sshll.u32 1, %s3
    %s5 = ssub.s32 %s4, 1
    %s6 = sshrl.u32 %s5, 1
    %s7 = sor.u32 %s5, %s6
    %s8 = sand.u32 %s7, 85
    %s9 = sshrl.u32 %s8, 1
    %s10 = sor.u32 %s8, %s9
    %s11 = sand.u32 51, %s10
    %s12 = sshrl.u32 %s11, 2
    %s13 = sor.u32 %s11, %s12
    %s14 = sand.u32 15, %s13
    %v15 = vld [vmem:[%s0] sm:%s14]
    %v16 = vunpack.c.l.bf16 %v15
    %v17 = vunpack.c.h.bf16 %v15
    %18 = vst [vmem:[#allocation1] sm:%s5] %v16
    %v19 = vld [vmem:[#allocation1] sm:$0x1]
    %vm20 = vcmask 130048
    %21 = vst.msk [vmem:[#allocation0] sm:$0x1] %vm20, %v19
    %s22 = scalar_lea.vmem [#allocation1], 1
    %v23 = vld [vmem:[%s22] sm:$0x1]
    %24 = vrot.lane.b32.xlu0 %v23, 16
    %v25 = vpop.permute.xlu0 %24
    %vm26 = vcmask 261248
    %27 = vst.msk [vmem:[#allocation0] sm:$0x1] %vm26, %v25
    %s29 = smul.u32 1, 2
    %s30 = sshll.u32 1, %s29
    %s31 = ssub.s32 %s30, 1
    %s32 = sshrl.u32 %s29, 1
    %v33 = vld [vmem:[#allocation0] sm:%s31]
    %v34 = vpack.c.bf16 0.0, %v33
    %s35 = sshll.u32 1, %s32
    %s36 = ssub.s32 %s35, 1
    %37 = vst [vmem:[%s1] sm:%s36] %v34

// kernel: wlml_forward.1
$region0: #{wlml_forward.1}
  #allocation0 [shape = 'u32[]', space=smem, size = 0x4, offset = 0x4, fixed_abs, tag = 'smem constant byte address 0x4 - core index']
  #allocation1 [shape = 'u32[144,128]{1,0:T(1,128)}', space=vmem, size = 0x12000, scoped, tag = 'internal scratch']
  %s0 = inlined_call_operand.vmem [shape: bf16[64,128], index: 0, kind: input, shape index: {}]
  %s1 = inlined_call_operand.vmem [shape: bf16[288,128], index: 1, kind: input, shape index: {}]
  %s2 = inlined_call_operand.vmem [shape: f32[8,128], index: 2, kind: input, shape index: {}]
  %s3 = inlined_call_operand.vmem [shape: f32[32,128], index: 3, kind: output, shape index: {}]
  %s4 = sld [smem:[#allocation0]]
  $region22: #{wlml_forward.1} parent=0
    _
  %s6 = ssub.s32 1, %s4
  %s7 = scalar_select 0, %s6, %s4
  // Predicated region
  $region2: #{wlml_forward.1} parent=0 // pred_check
    _
  $region3: #{wlml_forward.1} parent=0 // pred_check_branch
    %9 = sbr.rel (0) target = $region5
  $region4: #{wlml_forward.1} parent=0 // pred_region
    _
  $region5: #{wlml_forward.1} parent=0 // pred_fallthru
    _
  // Predicated region
  $region6: #{wlml_forward.1} parent=0 // pred_check
    _
  $region7: #{wlml_forward.1} parent=0 // pred_check_branch
    %11 = sbr.rel (0) target = $region9
  $region8: #{wlml_forward.1} parent=0 // pred_region
    _
  $region9: #{wlml_forward.1} parent=0 // pred_fallthru
    _
  // Predicated region
  $region10: #{wlml_forward.1} parent=0 // pred_check
    _
  $region11: #{wlml_forward.1} parent=0 // pred_check_branch
    %13 = sbr.rel (0) target = $region13
  $region12: #{wlml_forward.1} parent=0 // pred_region
    _
  $region13: #{wlml_forward.1} parent=0 // pred_fallthru
    _
  %v17 = vld [vmem:[%s0] sm:$0xf]
  %v18 = vld [vmem:[%s0 + $0x4] sm:$0xf]
  %v19 = vld [vmem:[%s0 + $0x8] sm:$0xf]
  %v20 = vld [vmem:[%s0 + $0xc] sm:$0xf]
  %v21 = vld [vmem:[%s0 + $0x10] sm:$0xf]
  %v22 = vld [vmem:[%s0 + $0x14] sm:$0xf]
  %v23 = vld [vmem:[%s0 + $0x18] sm:$0xf]
  %v24 = vld [vmem:[%s0 + $0x1c] sm:$0xf]
  %v25 = vld [vmem:[%s1] sm:$0xf]
  %v26 = vld [vmem:[%s1 + $0x4] sm:$0xf]
  %v27 = vld [vmem:[%s1 + $0x8] sm:$0xf]
  %v28 = vld [vmem:[%s1 + $0xc] sm:$0xf]
  %v29 = vld [vmem:[%s1 + $0x10] sm:$0xf]
  %v30 = vld [vmem:[%s1 + $0x14] sm:$0xf]
  %v31 = vld [vmem:[%s1 + $0x18] sm:$0xf]
  %v32 = vld [vmem:[%s1 + $0x1c] sm:$0xf]
  %v33 = vld [vmem:[%s1 + $0x20] sm:$0xf]
  %v34 = vld [vmem:[%s1 + $0x24] sm:$0xf]
  %v35 = vld [vmem:[%s1 + $0x28] sm:$0xf]
  %v36 = vld [vmem:[%s1 + $0x2c] sm:$0xf]
  %v37 = vld [vmem:[%s1 + $0x30] sm:$0xf]
  %v38 = vld [vmem:[%s1 + $0x34] sm:$0xf]
  %v39 = vld [vmem:[%s1 + $0x38] sm:$0xf]
  %v40 = vld [vmem:[%s1 + $0x3c] sm:$0xf]
  %v49 = vunpack.c.l.b16 %v17
  %v50 = vunpack.c.l.b16 %v18
  %v51 = vunpack.c.l.b16 %v19
  %v52 = vunpack.c.l.b16 %v20
  %v53 = vunpack.c.l.b16 %v21
  %v54 = vunpack.c.l.b16 %v22
  %v55 = vunpack.c.l.b16 %v23
  %v56 = vunpack.c.l.b16 %v24
  %v57 = vpack.c.b16 %v50, %v49
  %v58 = vpack.c.b16 %v52, %v51
  %v59 = vpack.c.b16 %v54, %v53
  %v60 = vpack.c.b16 %v56, %v55
  %v81 = vunpack.c.l.b16 %v25
  %v82 = vunpack.c.l.b16 %v26
  %v83 = vunpack.c.l.b16 %v27
  %v84 = vunpack.c.l.b16 %v28
  %v85 = vunpack.c.l.b16 %v29
  %v86 = vunpack.c.l.b16 %v30
  %v87 = vunpack.c.l.b16 %v31
  %v88 = vunpack.c.l.b16 %v32
  %v89 = vunpack.c.l.b16 %v33
  %v90 = vunpack.c.l.b16 %v34
  %v91 = vunpack.c.l.b16 %v35
  %v92 = vunpack.c.l.b16 %v36
  %v93 = vunpack.c.l.b16 %v37
  %v94 = vunpack.c.l.b16 %v38
  %v95 = vunpack.c.l.b16 %v39
  %v96 = vunpack.c.l.b16 %v40
  %v97 = vpack.c.b16 %v82, %v81
  %v98 = vpack.c.b16 %v84, %v83
  %v99 = vpack.c.b16 %v86, %v85
  %v100 = vpack.c.b16 %v88, %v87
  %v101 = vpack.c.b16 %v90, %v89
  %v102 = vpack.c.b16 %v92, %v91
  %v103 = vpack.c.b16 %v94, %v93
  %v104 = vpack.c.b16 %v96, %v95
  %113 = vmatprep.subr.bf16.mxu0 0
  %114 = vmatpush1.bf16.msra.mxu0 %v104
  %115 = vmatprep.subr.bf16.mxu0 0
  %116 = vmatpush1.bf16.msra.mxu0 %v103
  %117 = vmatprep.subr.bf16.mxu0 0
  %118 = vmatpush1.bf16.msra.mxu0 %v102
  %119 = vmatprep.subr.bf16.mxu0 0
  %120 = vmatpush1.bf16.msra.mxu0 %v101
  %121 = vmatprep.subr.bf16.mxu0 0
  %122 = vmatpush1.bf16.msra.mxu0 %v100
  %123 = vmatprep.subr.bf16.mxu0 0
  %124 = vmatpush1.bf16.msra.mxu0 %v99
  %125 = vmatprep.subr.bf16.mxu0 0
  %126 = vmatpush1.bf16.msra.mxu0 %v98
  %127 = vmatprep.subr.bf16.mxu0 0
  %128 = vmatpush1.bf16.msra.mxu0 %v97
  %129 = vmatprep.subr.bf16.mxu0 0
  %130 = vmatpush2.bf16.msra.mxu0 0
  %131 = vmatprep.subr.bf16.mxu0 0
  %132 = vmatpush2.bf16.msra.mxu0 0
  %133 = vmatprep.subr.bf16.mxu0 0
  %134 = vmatpush2.bf16.msra.mxu0 0
  %135 = vmatprep.subr.bf16.mxu0 0
  %136 = vmatpush2.bf16.msra.mxu0 0
  %137 = vmatprep.subr.bf16.mxu0 0
  %138 = vmatpush2.bf16.msra.mxu0 0
  %139 = vmatprep.subr.bf16.mxu0 0
  %140 = vmatpush2.bf16.msra.mxu0 0
  %141 = vmatprep.subr.bf16.mxu0 0
  %142 = vmatpush2.bf16.msra.mxu0 0
  %143 = vmatprep.subr.bf16.mxu0 0
  %144 = vmatpush2.bf16.msra.mxu0 0
  %145 = vmatprep.mubr.bf16.mxu0 0
  %146 = vmatmul.mubr.bf16.gmra.mxu0 %v57
  %v147 = vpop.f32.mrf.mxu0
  %v148 = vadd.f32 0.0, %v147
  %v149 = vpop.f32.mrf.mxu0
  %v150 = vpop.f32.mrf.mxu0
  %v151 = vadd.f32 0.0, %v150
  %v152 = vpop.f32.mrf.mxu0
  %153 = vmatprep.mubr.bf16.mxu0 0
  %154 = vmatmul.mubr.bf16.gmra.mxu0 %v58
  %v155 = vpop.f32.mrf.mxu0
  %v156 = vadd.f32 0.0, %v155
  %v157 = vpop.f32.mrf.mxu0
  %v158 = vpop.f32.mrf.mxu0
  %v159 = vadd.f32 0.0, %v158
  %v160 = vpop.f32.mrf.mxu0
  %161 = vmatprep.mubr.bf16.mxu0 0
  %162 = vmatmul.mubr.bf16.gmra.mxu0 %v59
  %v163 = vpop.f32.mrf.mxu0
  %v164 = vadd.f32 0.0, %v163
  %v165 = vpop.f32.mrf.mxu0
  %v166 = vpop.f32.mrf.mxu0
  %v167 = vadd.f32 0.0, %v166
  %v168 = vpop.f32.mrf.mxu0
  %169 = vmatprep.mubr.bf16.mxu0 0
  %170 = vmatmul.mubr.bf16.gmra.mxu0 %v60
  %v171 = vpop.f32.mrf.mxu0
  %v172 = vadd.f32 0.0, %v171
  %v173 = vpop.f32.mrf.mxu0
  %v174 = vpop.f32.mrf.mxu0
  %v175 = vadd.f32 0.0, %v174
  %v176 = vpop.f32.mrf.mxu0
  %177 = vdwg.mxu0
  %v178 = vld [vmem:[%s2] sm:$0x1]
  %v179 = vlaneseq
  %v180 = vshrl.u32 %v179, 7
  %v181 = vsub.s32 0, %v180
  %v182 = vrot.slane %v178, %v181
  %v183 = vadd.f32 %v148, %v182
  %v184 = vadd.f32 %v151, %v182
  %v185 = vadd.f32 %v156, %v182
  %v186 = vadd.f32 %v159, %v182
  %v187 = vadd.f32 %v164, %v182
  %v188 = vadd.f32 %v167, %v182
  %v189 = vadd.f32 %v172, %v182
  %v190 = vadd.f32 %v175, %v182
  %v191 = vmax.f32 %v183, 0.0
  %v192 = vmax.f32 %v184, 0.0
  %v193 = vmax.f32 %v185, 0.0
  %v194 = vmax.f32 %v186, 0.0
  %v195 = vmax.f32 %v187, 0.0
  %v196 = vmax.f32 %v188, 0.0
  %v197 = vmax.f32 %v189, 0.0
  %v198 = vmax.f32 %v190, 0.0
  %v199 = vadd.f32 %v191, %v195
  %v200 = vadd.f32 %v192, %v196
  %v201 = vadd.f32 %v193, %v197
  %v202 = vadd.f32 %v194, %v198
  %v203 = vmul.f32 %v199, 0.5
  %v204 = vmul.f32 %v200, 0.5
  %v205 = vmul.f32 %v201, 0.5
  %v206 = vmul.f32 %v202, 0.5
  %v207 = vld [vmem:[%s2 + $0x1] sm:$0x1]
  %vm208 = vcmp.gt.bf16.partialorder %v17, 0
  %vm209 = vcmp.gt.bf16.partialorder %v18, 0
  %vm210 = vcmp.gt.bf16.partialorder %v19, 0
  %vm211 = vcmp.gt.bf16.partialorder %v20, 0
  %v212 = vsel %vm208, 65537, 0
  %v213 = vsel %vm209, 65537, 0
  %v214 = vsel %vm210, 65537, 0
  %v215 = vsel %vm211, 65537, 0
  %v216 = vunpack.c.l.b16 %v212
  %v217 = vunpack.c.l.b16 %v213
  %v218 = vunpack.c.l.b16 %v214
  %v219 = vunpack.c.l.b16 %v215
  %vm220 = vcmp.ne.s32.totalorder %v216, 0
  %vm221 = vcmp.ne.s32.totalorder %v217, 0
  %vm222 = vcmp.ne.s32.totalorder %v218, 0
  %vm223 = vcmp.ne.s32.totalorder %v219, 0
  %v224 = vsel %vm220, 1, 0
  %v225 = vsel %vm221, 1, 0
  %v226 = vsel %vm222, 1, 0
  %v227 = vsel %vm223, 1, 0
  %228 = vrot.lane.b32.xlu0 %v224, 112
  %v229 = vpop.permute.xlu0 %228
  %230 = vrot.lane.b32.xlu0 %v225, 112
  %v231 = vpop.permute.xlu0 %230
  %232 = vrot.lane.b32.xlu0 %v226, 112
  %v233 = vpop.permute.xlu0 %232
  %234 = vrot.lane.b32.xlu0 %v227, 112
  %v235 = vpop.permute.xlu0 %234
  %vm236 = vcmp.ne.s32.totalorder %v229, 0
  %vm237 = vcmp.ne.s32.totalorder %v231, 0
  %vm238 = vcmp.ne.s32.totalorder %v233, 0
  %vm239 = vcmp.ne.s32.totalorder %v235, 0
  %v240 = vsel %vm236, 1, 0
  %v241 = vsel %vm237, 1, 0
  %v242 = vsel %vm238, 1, 0
  %v243 = vsel %vm239, 1, 0
  %244 = vset.pattern.permute.xlu0 0
  %245 = vperm.xlu0 %244, %v240
  %v246 = vpop.permute.xlu0 %245
  %247 = vset.pattern.permute.xlu0 0
  %248 = vperm.xlu0 %247, %v241
  %v249 = vpop.permute.xlu0 %248
  %250 = vset.pattern.permute.xlu0 0
  %251 = vperm.xlu0 %250, %v242
  %v252 = vpop.permute.xlu0 %251
  %253 = vset.pattern.permute.xlu0 0
  %254 = vperm.xlu0 %253, %v243
  %v255 = vpop.permute.xlu0 %254
  %vm256 = vcmp.eq.s32.totalorder %v246, 1
  %vm257 = vcmp.eq.s32.totalorder %v249, 1
  %vm258 = vcmp.eq.s32.totalorder %v252, 1
  %vm259 = vcmp.eq.s32.totalorder %v255, 1
  %v260 = vlaneseq
  %v261 = vshrl.u32 %v260, 7
  %v262 = vsub.s32 0, %v261
  %v263 = vrot.slane %v207, %v262
  %268 = vrot.lane.b32.xlu0 %v148, 96
  %v269 = vpop.permute.xlu0 %268
  %270 = vrot.lane.b32.xlu0 %v151, 96
  %v271 = vpop.permute.xlu0 %270
  %272 = vrot.lane.b32.xlu0 %v156, 96
  %v273 = vpop.permute.xlu0 %272
  %274 = vrot.lane.b32.xlu0 %v159, 96
  %v275 = vpop.permute.xlu0 %274
  %v280 = vsel %vm256, %v263, %v269
  %v281 = vsel %vm257, %v263, %v271
  %v282 = vsel %vm258, %v263, %v273
  %v283 = vsel %vm259, %v263, %v275
  %284 = vrot.lane.b32.xlu0 %v224, 111
  %v285 = vpop.permute.xlu0 %284
  %286 = vrot.lane.b32.xlu0 %v225, 111
  %v287 = vpop.permute.xlu0 %286
  %288 = vrot.lane.b32.xlu0 %v226, 111
  %v289 = vpop.permute.xlu0 %288
  %290 = vrot.lane.b32.xlu0 %v227, 111
  %v291 = vpop.permute.xlu0 %290
  %vm292 = vcmp.ne.s32.totalorder %v285, 0
  %vm293 = vcmp.ne.s32.totalorder %v287, 0
  %vm294 = vcmp.ne.s32.totalorder %v289, 0
  %vm295 = vcmp.ne.s32.totalorder %v291, 0
  %v296 = vsel %vm292, 1, 0
  %v297 = vsel %vm293, 1, 0
  %v298 = vsel %vm294, 1, 0
  %v299 = vsel %vm295, 1, 0
  %300 = vset.pattern.permute.xlu0 0
  %301 = vperm.xlu0 %300, %v296
  %v302 = vpop.permute.xlu0 %301
  %303 = vset.pattern.permute.xlu0 0
  %304 = vperm.xlu0 %303, %v297
  %v305 = vpop.permute.xlu0 %304
  %306 = vset.pattern.permute.xlu0 0
  %307 = vperm.xlu0 %306, %v298
  %v308 = vpop.permute.xlu0 %307
  %309 = vset.pattern.permute.xlu0 0
  %310 = vperm.xlu0 %309, %v299
  %v311 = vpop.permute.xlu0 %310
  %vm312 = vcmp.eq.s32.totalorder %v302, 1
  %vm313 = vcmp.eq.s32.totalorder %v305, 1
  %vm314 = vcmp.eq.s32.totalorder %v308, 1
  %vm315 = vcmp.eq.s32.totalorder %v311, 1
  %v316 = vsel %vm312, %v203, %v280
  %v317 = vsel %vm313, %v204, %v281
  %v318 = vsel %vm314, %v205, %v282
  %v319 = vsel %vm315, %v206, %v283
  %v320 = vpack.c.bf16 %v317, %v316
  %v321 = vpack.c.bf16 %v319, %v318
  %v322 = vld [vmem:[%s1 + $0x40] sm:$0xf]
  %v323 = vld [vmem:[%s1 + $0x44] sm:$0xf]
  %v324 = vld [vmem:[%s1 + $0x48] sm:$0xf]
  %v325 = vld [vmem:[%s1 + $0x4c] sm:$0xf]
  %v330 = vunpack.c.l.b16 %v322
  %v331 = vunpack.c.l.b16 %v323
  %v332 = vunpack.c.l.b16 %v324
  %v333 = vunpack.c.l.b16 %v325
  %v334 = vpack.c.b16 %v331, %v330
  %v335 = vpack.c.b16 %v333, %v332
  %vm338 = vcmask 261120
  %v340 = vsel %vm338, %v320, 0
  %v343 = vsel %vm338, %v321, 0
  %345 = vmatprep.subr.bf16.mxu0 0
  %346 = vmatpush1.bf16.msra.mxu0 0
  %347 = vmatprep.subr.bf16.mxu0 0
  %348 = vmatpush1.bf16.msra.mxu0 0
  %349 = vmatprep.subr.bf16.mxu0 0
  %350 = vmatpush1.bf16.msra.mxu0 0
  %351 = vmatprep.subr.bf16.mxu0 0
  %352 = vmatpush1.bf16.msra.mxu0 0
  %353 = vmatprep.subr.bf16.mxu0 0
  %354 = vmatpush1.bf16.msra.mxu0 0
  %355 = vmatprep.subr.bf16.mxu0 0
  %356 = vmatpush1.bf16.msra.mxu0 0
  %357 = vmatprep.subr.bf16.mxu0 0
  %358 = vmatpush1.bf16.msra.mxu0 %v335
  %359 = vmatprep.subr.bf16.mxu0 0
  %360 = vmatpush1.bf16.msra.mxu0 %v334
  %361 = vmatprep.subr.bf16.mxu0 0
  %362 = vmatpush2.bf16.msra.mxu0 0
  %363 = vmatprep.subr.bf16.mxu0 0
  %364 = vmatpush2.bf16.msra.mxu0 0
  %365 = vmatprep.subr.bf16.mxu0 0
  %366 = vmatpush2.bf16.msra.mxu0 0
  %367 = vmatprep.subr.bf16.mxu0 0
  %368 = vmatpush2.bf16.msra.mxu0 0
  %369 = vmatprep.subr.bf16.mxu0 0
  %370 = vmatpush2.bf16.msra.mxu0 0
  %371 = vmatprep.subr.bf16.mxu0 0
  %372 = vmatpush2.bf16.msra.mxu0 0
  %373 = vmatprep.subr.bf16.mxu0 0
  %374 = vmatpush2.bf16.msra.mxu0 0
  %375 = vmatprep.subr.bf16.mxu0 0
  %376 = vmatpush2.bf16.msra.mxu0 0
  %377 = vmatprep.mubr.bf16.mxu0 0
  %378 = vmatmul.mubr.bf16.gmra.mxu0 %v340
  %v379 = vpop.f32.mrf.mxu0
  %v380 = vadd.f32 0.0, %v379
  %v381 = vpop.f32.mrf.mxu0
  %v382 = vpop.f32.mrf.mxu0
  %v383 = vadd.f32 0.0, %v382
  %v384 = vpop.f32.mrf.mxu0
  %385 = vmatprep.mubr.bf16.mxu0 0
  %386 = vmatmul.mubr.bf16.gmra.mxu0 %v343
  %v387 = vpop.f32.mrf.mxu0
  %v388 = vadd.f32 0.0, %v387
  %v389 = vpop.f32.mrf.mxu0
  %v390 = vpop.f32.mrf.mxu0
  %v391 = vadd.f32 0.0, %v390
  %v392 = vpop.f32.mrf.mxu0
  %393 = vdwg.mxu0
  %v394 = vpack.c.bf16 %v383, %v380
  %v395 = vpack.c.bf16 %v391, %v388
  %398 = vrot.lane.b32.xlu0 %v394, 96
  %v399 = vpop.permute.xlu0 %398
  %400 = vrot.lane.b32.xlu0 %v395, 96
  %v401 = vpop.permute.xlu0 %400
  %v403 = vsel %vm338, %v394, 0
  %v406 = vsel %vm338, %v395, 0
  %v409 = vsel %vm338, %v399, 0
  %v412 = vsel %vm338, %v401, 0
  %414 = vmatprep.subr.bf16.mxu0 0
  %415 = vmatpush1.bf16.xpose.msra.mxu0 0
  %416 = vmatprep.subr.bf16.mxu0 0
  %417 = vmatpush1.bf16.xpose.msra.mxu0 0
  %418 = vmatprep.subr.bf16.mxu0 0
  %419 = vmatpush1.bf16.xpose.msra.mxu0 0
  %420 = vmatprep.subr.bf16.mxu0 0
  %421 = vmatpush1.bf16.xpose.msra.mxu0 0
  %422 = vmatprep.subr.bf16.mxu0 0
  %423 = vmatpush1.bf16.xpose.msra.mxu0 0
  %424 = vmatprep.subr.bf16.mxu0 0
  %425 = vmatpush1.bf16.xpose.msra.mxu0 0
  %426 = vmatprep.subr.bf16.mxu0 0
  %427 = vmatpush1.bf16.xpose.msra.mxu0 %v412
  %428 = vmatprep.subr.bf16.mxu0 0
  %429 = vmatpush1.bf16.xpose.msra.mxu0 %v409
  %430 = vmatprep.subr.bf16.mxu0 0
  %431 = vmatpush2.bf16.xpose.msra.mxu0 0
  %432 = vmatprep.subr.bf16.mxu0 0
  %433 = vmatpush2.bf16.xpose.msra.mxu0 0
  %434 = vmatprep.subr.bf16.mxu0 0
  %435 = vmatpush2.bf16.xpose.msra.mxu0 0
  %436 = vmatprep.subr.bf16.mxu0 0
  %437 = vmatpush2.bf16.xpose.msra.mxu0 0
  %438 = vmatprep.subr.bf16.mxu0 0
  %439 = vmatpush2.bf16.xpose.msra.mxu0 0
  %440 = vmatprep.subr.bf16.mxu0 0
  %441 = vmatpush2.bf16.xpose.msra.mxu0 0
  %442 = vmatprep.subr.bf16.mxu0 0
  %443 = vmatpush2.bf16.xpose.msra.mxu0 0
  %444 = vmatprep.subr.bf16.mxu0 0
  %445 = vmatpush2.bf16.xpose.msra.mxu0 0
  %446 = vmatprep.mubr.bf16.mxu0 0
  %447 = vmatmul.mubr.bf16.gmra.mxu0 %v403
  %v448 = vpop.f32.mrf.mxu0
  %v449 = vadd.f32 0.0, %v448
  %v450 = vpop.f32.mrf.mxu0
  %v451 = vpop.f32.mrf.mxu0
  %v452 = vadd.f32 0.0, %v451
  %v453 = vpop.f32.mrf.mxu0
  %454 = vmatprep.mubr.bf16.mxu0 0
  %455 = vmatmul.mubr.bf16.gmra.mxu0 %v406
  %v456 = vpop.f32.mrf.mxu0
  %v457 = vadd.f32 0.0, %v456
  %v458 = vpop.f32.mrf.mxu0
  %v459 = vpop.f32.mrf.mxu0
  %v460 = vadd.f32 0.0, %v459
  %v461 = vpop.f32.mrf.mxu0
  %462 = vdwg.mxu0
  %v463 = vmul.f32 %v449, 0.17677669
  %v464 = vmul.f32 %v452, 0.17677669
  %v465 = vmul.f32 %v457, 0.17677669
  %v466 = vmul.f32 %v460, 0.17677669
  %467 = vrot.lane.b32.xlu0 %v224, 96
  %v468 = vpop.permute.xlu0 %467
  %469 = vrot.lane.b32.xlu0 %v225, 96
  %v470 = vpop.permute.xlu0 %469
  %471 = vrot.lane.b32.xlu0 %v226, 96
  %v472 = vpop.permute.xlu0 %471
  %473 = vrot.lane.b32.xlu0 %v227, 96
  %v474 = vpop.permute.xlu0 %473
  %vm475 = vcmp.ne.s32.totalorder %v468, 0
  %vm476 = vcmp.ne.s32.totalorder %v470, 0
  %vm477 = vcmp.ne.s32.totalorder %v472, 0
  %vm478 = vcmp.ne.s32.totalorder %v474, 0
  %v479 = vsel %vm475, %v463, -1e+09
  %v480 = vsel %vm476, %v464, -1e+09
  %v481 = vsel %vm477, %v465, -1e+09
  %v482 = vsel %vm478, %v466, -1e+09
  %v483 = vsel %vm338, %v479, -inf
  %484 = vmax.xlane.f32.xlu0 %v483
  %v485 = vpop.xlane.xlu0 %484
  %v486 = vsel %vm338, %v480, -inf
  %487 = vmax.xlane.f32.xlu0 %v486
  %v488 = vpop.xlane.xlu0 %487
  %v489 = vsel %vm338, %v481, -inf
  %490 = vmax.xlane.f32.xlu0 %v489
  %v491 = vpop.xlane.xlu0 %490
  %v492 = vsel %vm338, %v482, -inf
  %493 = vmax.xlane.f32.xlu0 %v492
  %v494 = vpop.xlane.xlu0 %493
  %v495 = vsub.f32 %v479, %v485
  %v496 = vsub.f32 %v480, %v488
  %v497 = vsub.f32 %v481, %v491
  %v498 = vsub.f32 %v482, %v494
  %v499 = vmul.f32 %v495, 1.442695
  %v500 = vpow.pop %v499
  %v501 = vmul.f32 %v496, 1.442695
  %v502 = vpow.pop %v501
  %v503 = vmul.f32 %v497, 1.442695
  %v504 = vpow.pop %v503
  %v505 = vmul.f32 %v498, 1.442695
  %v506 = vpow.pop %v505
  %v507 = vsel %vm338, %v500, 0.0
  %508 = vadd.xlane.f32.xlu0 %v507
  %v509 = vpop.xlane.xlu0 %508
  %v510 = vsel %vm338, %v502, 0.0
  %511 = vadd.xlane.f32.xlu0 %v510
  %v512 = vpop.xlane.xlu0 %511
  %v513 = vsel %vm338, %v504, 0.0
  %514 = vadd.xlane.f32.xlu0 %v513
  %v515 = vpop.xlane.xlu0 %514
  %v516 = vsel %vm338, %v506, 0.0
  %517 = vadd.xlane.f32.xlu0 %v516
  %v518 = vpop.xlane.xlu0 %517
  %v519 = vrcp.pop %v509
  %v520 = vmul.f32 %v500, %v519
  %v521 = vrcp.pop %v512
  %v522 = vmul.f32 %v502, %v521
  %v523 = vrcp.pop %v515
  %v524 = vmul.f32 %v504, %v523
  %v525 = vrcp.pop %v518
  %v526 = vmul.f32 %v506, %v525
  %v527 = vpack.c.bf16 %v522, %v520
  %v528 = vpack.c.bf16 %v526, %v524
  %529 = vrot.lane.b32.xlu0 %v394, 64
  %v530 = vpop.permute.xlu0 %529
  %531 = vrot.lane.b32.xlu0 %v395, 64
  %v532 = vpop.permute.xlu0 %531
  %v536 = vsel %vm338, %v527, 0
  %v539 = vsel %vm338, %v528, 0
  %541 = vmatprep.subr.bf16.mxu0 0
  %542 = vmatpush1.bf16.msra.mxu0 0
  %543 = vmatprep.subr.bf16.mxu0 0
  %544 = vmatpush1.bf16.msra.mxu0 0
  %545 = vmatprep.subr.bf16.mxu0 0
  %546 = vmatpush1.bf16.msra.mxu0 0
  %547 = vmatprep.subr.bf16.mxu0 0
  %548 = vmatpush1.bf16.msra.mxu0 0
  %549 = vmatprep.subr.bf16.mxu0 0
  %550 = vmatpush1.bf16.msra.mxu0 0
  %551 = vmatprep.subr.bf16.mxu0 0
  %552 = vmatpush1.bf16.msra.mxu0 0
  %553 = vmatprep.subr.bf16.mxu0 0
  %554 = vmatpush1.bf16.msra.mxu0 %v532
  %555 = vmatprep.subr.bf16.mxu0 0
  %556 = vmatpush1.bf16.msra.mxu0 %v530
  %557 = vmatprep.subr.bf16.mxu0 0
  %558 = vmatpush2.bf16.msra.mxu0 0
  %559 = vmatprep.subr.bf16.mxu0 0
  %560 = vmatpush2.bf16.msra.mxu0 0
  %561 = vmatprep.subr.bf16.mxu0 0
  %562 = vmatpush2.bf16.msra.mxu0 0
  %563 = vmatprep.subr.bf16.mxu0 0
  %564 = vmatpush2.bf16.msra.mxu0 0
  %565 = vmatprep.subr.bf16.mxu0 0
  %566 = vmatpush2.bf16.msra.mxu0 0
  %567 = vmatprep.subr.bf16.mxu0 0
  %568 = vmatpush2.bf16.msra.mxu0 0
  %569 = vmatprep.subr.bf16.mxu0 0
  %570 = vmatpush2.bf16.msra.mxu0 0
  %571 = vmatprep.subr.bf16.mxu0 0
  %572 = vmatpush2.bf16.msra.mxu0 0
  %573 = vmatprep.mubr.bf16.mxu0 0
  %574 = vmatmul.mubr.bf16.gmra.mxu0 %v536
  %v575 = vpop.f32.mrf.mxu0
  %v576 = vadd.f32 0.0, %v575
  %v577 = vpop.f32.mrf.mxu0
  %v578 = vpop.f32.mrf.mxu0
  %v579 = vadd.f32 0.0, %v578
  %v580 = vpop.f32.mrf.mxu0
  %581 = vmatprep.mubr.bf16.mxu0 0
  %582 = vmatmul.mubr.bf16.gmra.mxu0 %v539
  %v583 = vpop.f32.mrf.mxu0
  %v584 = vadd.f32 0.0, %v583
  %v585 = vpop.f32.mrf.mxu0
  %v586 = vpop.f32.mrf.mxu0
  %v587 = vadd.f32 0.0, %v586
  %v588 = vpop.f32.mrf.mxu0
  %589 = vdwg.mxu0
  %v590 = vadd.f32 %v316, %v576
  %v591 = vadd.f32 %v317, %v579
  %v592 = vadd.f32 %v318, %v584
  %v593 = vadd.f32 %v319, %v587
  %v594 = vpack.c.bf16 %v591, %v590
  %v595 = vpack.c.bf16 %v593, %v592
  %v596 = vld [vmem:[%s1 + $0x50] sm:$0xf]
  %v597 = vld [vmem:[%s1 + $0x54] sm:$0xf]
  %v598 = vld [vmem:[%s1 + $0x58] sm:$0xf]
  %v599 = vld [vmem:[%s1 + $0x5c] sm:$0xf]
  %v600 = vld [vmem:[%s2 + $0x2] sm:$0x1]
  %v601 = vlaneseq
  %v602 = vshrl.u32 %v601, 7
  %v603 = vsub.s32 0, %v602
  %v604 = vrot.slane %v600, %v603
  %v609 = vunpack.c.l.b16 %v596
  %v610 = vunpack.c.l.b16 %v597
  %v611 = vunpack.c.l.b16 %v598
  %v612 = vunpack.c.l.b16 %v599
  %v613 = vpack.c.b16 %v610, %v609
  %v614 = vpack.c.b16 %v612, %v611
  %v618 = vsel %vm338, %v594, 0
  %v621 = vsel %vm338, %v595, 0
  %623 = vmatprep.subr.bf16.mxu0 0
  %624 = vmatpush1.bf16.msra.mxu0 0
  %625 = vmatprep.subr.bf16.mxu0 0
  %626 = vmatpush1.bf16.msra.mxu0 0
  %627 = vmatprep.subr.bf16.mxu0 0
  %628 = vmatpush1.bf16.msra.mxu0 0
  %629 = vmatprep.subr.bf16.mxu0 0
  %630 = vmatpush1.bf16.msra.mxu0 0
  %631 = vmatprep.subr.bf16.mxu0 0
  %632 = vmatpush1.bf16.msra.mxu0 0
  %633 = vmatprep.subr.bf16.mxu0 0
  %634 = vmatpush1.bf16.msra.mxu0 0
  %635 = vmatprep.subr.bf16.mxu0 0
  %636 = vmatpush1.bf16.msra.mxu0 %v614
  %637 = vmatprep.subr.bf16.mxu0 0
  %638 = vmatpush1.bf16.msra.mxu0 %v613
  %639 = vmatprep.subr.bf16.mxu0 0
  %640 = vmatpush2.bf16.msra.mxu0 0
  %641 = vmatprep.subr.bf16.mxu0 0
  %642 = vmatpush2.bf16.msra.mxu0 0
  %643 = vmatprep.subr.bf16.mxu0 0
  %644 = vmatpush2.bf16.msra.mxu0 0
  %645 = vmatprep.subr.bf16.mxu0 0
  %646 = vmatpush2.bf16.msra.mxu0 0
  %647 = vmatprep.subr.bf16.mxu0 0
  %648 = vmatpush2.bf16.msra.mxu0 0
  %649 = vmatprep.subr.bf16.mxu0 0
  %650 = vmatpush2.bf16.msra.mxu0 0
  %651 = vmatprep.subr.bf16.mxu0 0
  %652 = vmatpush2.bf16.msra.mxu0 0
  %653 = vmatprep.subr.bf16.mxu0 0
  %654 = vmatpush2.bf16.msra.mxu0 0
  %655 = vmatprep.mubr.bf16.mxu0 0
  %656 = vmatmul.mubr.bf16.gmra.mxu0 %v618
  %v657 = vpop.f32.mrf.mxu0
  %v658 = vadd.f32 %v604, %v657
  %v659 = vpop.f32.mrf.mxu0
  %v660 = vpop.f32.mrf.mxu0
  %v661 = vadd.f32 %v604, %v660
  %v662 = vpop.f32.mrf.mxu0
  %663 = vmatprep.mubr.bf16.mxu0 0
  %664 = vmatmul.mubr.bf16.gmra.mxu0 %v621
  %v665 = vpop.f32.mrf.mxu0
  %v666 = vadd.f32 %v604, %v665
  %v667 = vpop.f32.mrf.mxu0
  %v668 = vpop.f32.mrf.mxu0
  %v669 = vadd.f32 %v604, %v668
  %v670 = vpop.f32.mrf.mxu0
  %671 = vdwg.mxu0
  %v672 = vmax.f32 %v658, 0.0
  %v673 = vmax.f32 %v661, 0.0
  %v674 = vmax.f32 %v666, 0.0
  %v675 = vmax.f32 %v669, 0.0
  %v676 = vpack.c.bf16 %v673, %v672
  %v677 = vpack.c.bf16 %v675, %v674
  %v678 = vld [vmem:[%s1 + $0x60] sm:$0xf]
  %v679 = vld [vmem:[%s1 + $0x64] sm:$0xf]
  %v680 = vld [vmem:[%s1 + $0x68] sm:$0xf]
  %v681 = vld [vmem:[%s1 + $0x6c] sm:$0xf]
  %v682 = vld [vmem:[%s1 + $0x70] sm:$0xf]
  %v683 = vld [vmem:[%s1 + $0x74] sm:$0xf]
  %v684 = vld [vmem:[%s1 + $0x78] sm:$0xf]
  %v685 = vld [vmem:[%s1 + $0x7c] sm:$0xf]
  %v686 = vld [vmem:[%s2 + $0x3] sm:$0x1]
  %v687 = vlaneseq
  %v688 = vshrl.u32 %v687, 7
  %v689 = vsub.s32 0, %v688
  %v690 = vrot.slane %v686, %v689
  %v699 = vunpack.c.l.b16 %v678
  %v700 = vunpack.c.l.b16 %v679
  %v701 = vunpack.c.l.b16 %v680
  %v702 = vunpack.c.l.b16 %v681
  %v703 = vunpack.c.l.b16 %v682
  %v704 = vunpack.c.l.b16 %v683
  %v705 = vunpack.c.l.b16 %v684
  %v706 = vunpack.c.l.b16 %v685
  %v707 = vpack.c.b16 %v700, %v699
  %v708 = vpack.c.b16 %v702, %v701
  %v709 = vpack.c.b16 %v704, %v703
  %v710 = vpack.c.b16 %v706, %v705
  %vm715 = vcmask 523264
  %v717 = vsel %vm715, %v676, 0
  %v720 = vsel %vm715, %v677, 0
  %722 = vmatprep.subr.bf16.mxu0 0
  %723 = vmatpush1.bf16.msra.mxu0 0
  %724 = vmatprep.subr.bf16.mxu0 0
  %725 = vmatpush1.bf16.msra.mxu0 0
  %726 = vmatprep.subr.bf16.mxu0 0
  %727 = vmatpush1.bf16.msra.mxu0 0
  %728 = vmatprep.subr.bf16.mxu0 0
  %729 = vmatpush1.bf16.msra.mxu0 0
  %730 = vmatprep.subr.bf16.mxu0 0
  %731 = vmatpush1.bf16.msra.mxu0 %v710
  %732 = vmatprep.subr.bf16.mxu0 0
  %733 = vmatpush1.bf16.msra.mxu0 %v709
  %734 = vmatprep.subr.bf16.mxu0 0
  %735 = vmatpush1.bf16.msra.mxu0 %v708
  %736 = vmatprep.subr.bf16.mxu0 0
  %737 = vmatpush1.bf16.msra.mxu0 %v707
  %738 = vmatprep.subr.bf16.mxu0 0
  %739 = vmatpush2.bf16.msra.mxu0 0
  %740 = vmatprep.subr.bf16.mxu0 0
  %741 = vmatpush2.bf16.msra.mxu0 0
  %742 = vmatprep.subr.bf16.mxu0 0
  %743 = vmatpush2.bf16.msra.mxu0 0
  %744 = vmatprep.subr.bf16.mxu0 0
  %745 = vmatpush2.bf16.msra.mxu0 0
  %746 = vmatprep.subr.bf16.mxu0 0
  %747 = vmatpush2.bf16.msra.mxu0 0
  %748 = vmatprep.subr.bf16.mxu0 0
  %749 = vmatpush2.bf16.msra.mxu0 0
  %750 = vmatprep.subr.bf16.mxu0 0
  %751 = vmatpush2.bf16.msra.mxu0 0
  %752 = vmatprep.subr.bf16.mxu0 0
  %753 = vmatpush2.bf16.msra.mxu0 0
  %754 = vmatprep.mubr.bf16.mxu0 0
  %755 = vmatmul.mubr.bf16.gmra.mxu0 %v717
  %v756 = vpop.f32.mrf.mxu0
  %v757 = vadd.f32 %v690, %v756
  %v758 = vpop.f32.mrf.mxu0
  %v759 = vpop.f32.mrf.mxu0
  %v760 = vadd.f32 %v690, %v759
  %v761 = vpop.f32.mrf.mxu0
  %762 = vmatprep.mubr.bf16.mxu0 0
  %763 = vmatmul.mubr.bf16.gmra.mxu0 %v720
  %v764 = vpop.f32.mrf.mxu0
  %v765 = vadd.f32 %v690, %v764
  %v766 = vpop.f32.mrf.mxu0
  %v767 = vpop.f32.mrf.mxu0
  %v768 = vadd.f32 %v690, %v767
  %v769 = vpop.f32.mrf.mxu0
  %770 = vdwg.mxu0
  %v771 = vadd.f32 %v590, %v757
  %v772 = vadd.f32 %v591, %v760
  %v773 = vadd.f32 %v592, %v765
  %v774 = vadd.f32 %v593, %v768
  %v775 = vpack.c.bf16 %v772, %v771
  %v776 = vpack.c.bf16 %v774, %v773
  %v777 = vld [vmem:[%s1 + $0x80] sm:$0xf]
  %v778 = vld [vmem:[%s1 + $0x84] sm:$0xf]
  %v779 = vld [vmem:[%s1 + $0x88] sm:$0xf]
  %v780 = vld [vmem:[%s1 + $0x8c] sm:$0xf]
  %v781 = vld [vmem:[%s2 + $0x4] sm:$0x1]
  %v782 = vlaneseq
  %v783 = vshrl.u32 %v782, 7
  %v784 = vsub.s32 0, %v783
  %v785 = vrot.slane %v781, %v784
  %v790 = vunpack.c.l.b16 %v777
  %v791 = vunpack.c.l.b16 %v778
  %v792 = vunpack.c.l.b16 %v779
  %v793 = vunpack.c.l.b16 %v780
  %v794 = vpack.c.b16 %v791, %v790
  %v795 = vpack.c.b16 %v793, %v792
  %v799 = vsel %vm338, %v775, 0
  %v802 = vsel %vm338, %v776, 0
  %804 = vmatprep.subr.bf16.mxu0 0
  %805 = vmatpush1.bf16.msra.mxu0 0
  %806 = vmatprep.subr.bf16.mxu0 0
  %807 = vmatpush1.bf16.msra.mxu0 0
  %808 = vmatprep.subr.bf16.mxu0 0
  %809 = vmatpush1.bf16.msra.mxu0 0
  %810 = vmatprep.subr.bf16.mxu0 0
  %811 = vmatpush1.bf16.msra.mxu0 0
  %812 = vmatprep.subr.bf16.mxu0 0
  %813 = vmatpush1.bf16.msra.mxu0 0
  %814 = vmatprep.subr.bf16.mxu0 0
  %815 = vmatpush1.bf16.msra.mxu0 0
  %816 = vmatprep.subr.bf16.mxu0 0
  %817 = vmatpush1.bf16.msra.mxu0 %v795
  %818 = vmatprep.subr.bf16.mxu0 0
  %819 = vmatpush1.bf16.msra.mxu0 %v794
  %820 = vmatprep.subr.bf16.mxu0 0
  %821 = vmatpush2.bf16.msra.mxu0 0
  %822 = vmatprep.subr.bf16.mxu0 0
  %823 = vmatpush2.bf16.msra.mxu0 0
  %824 = vmatprep.subr.bf16.mxu0 0
  %825 = vmatpush2.bf16.msra.mxu0 0
  %826 = vmatprep.subr.bf16.mxu0 0
  %827 = vmatpush2.bf16.msra.mxu0 0
  %828 = vmatprep.subr.bf16.mxu0 0
  %829 = vmatpush2.bf16.msra.mxu0 0
  %830 = vmatprep.subr.bf16.mxu0 0
  %831 = vmatpush2.bf16.msra.mxu0 0
  %832 = vmatprep.subr.bf16.mxu0 0
  %833 = vmatpush2.bf16.msra.mxu0 0
  %834 = vmatprep.subr.bf16.mxu0 0
  %835 = vmatpush2.bf16.msra.mxu0 0
  %836 = vmatprep.mubr.bf16.mxu0 0
  %837 = vmatmul.mubr.bf16.gmra.mxu0 %v799
  %v838 = vpop.f32.mrf.mxu0
  %v839 = vadd.f32 %v785, %v838
  %v840 = vpop.f32.mrf.mxu0
  %v841 = vpop.f32.mrf.mxu0
  %v842 = vadd.f32 %v785, %v841
  %v843 = vpop.f32.mrf.mxu0
  %844 = vmatprep.mubr.bf16.mxu0 0
  %845 = vmatmul.mubr.bf16.gmra.mxu0 %v802
  %v846 = vpop.f32.mrf.mxu0
  %v847 = vadd.f32 %v785, %v846
  %v848 = vpop.f32.mrf.mxu0
  %v849 = vpop.f32.mrf.mxu0
  %v850 = vadd.f32 %v785, %v849
  %v851 = vpop.f32.mrf.mxu0
  %852 = vdwg.mxu0
  %853 = vst [vmem:[%s3] sm:$0xff] 0.0
  %854 = vst [vmem:[%s3 + $0x8] sm:$0xff] 0.0
  %855 = vst [vmem:[%s3 + $0x10] sm:$0xff] 0.0
  %856 = vst [vmem:[%s3 + $0x18] sm:$0xff] 0.0
  %858 = vrot.lane.b32.xlu0 %v839, 96
  %v859 = vpop.permute.xlu0 %858
  %vm861 = vcmask 195584
  %862 = vst.msk [vmem:[%s3] sm:$0xff] %vm861, %v859
  %v863 = vpack.c.bf16 %v842, %v842
  %v865 = vrot.slane %v775, 4
  %v867 = vsel %vm338, %v863, 0
  %v870 = vsel %vm338, %v865, 0
  %872 = vmatprep.subr.bf16.mxu0 0
  %873 = vmatpush1.bf16.xpose.msra.mxu0 0
  %874 = vmatprep.subr.bf16.mxu0 0
  %875 = vmatpush1.bf16.xpose.msra.mxu0 0
  %876 = vmatprep.subr.bf16.mxu0 0
  %877 = vmatpush1.bf16.xpose.msra.mxu0 0
  %878 = vmatprep.subr.bf16.mxu0 0
  %879 = vmatpush1.bf16.xpose.msra.mxu0 0
  %880 = vmatprep.subr.bf16.mxu0 0
  %881 = vmatpush1.bf16.xpose.msra.mxu0 0
  %882 = vmatprep.subr.bf16.mxu0 0
  %883 = vmatpush1.bf16.xpose.msra.mxu0 0
  %884 = vmatprep.subr.bf16.mxu0 0
  %885 = vmatpush1.bf16.xpose.msra.mxu0 0
  %886 = vmatprep.subr.bf16.mxu0 0
  %887 = vmatpush1.bf16.xpose.msra.mxu0 %v870
  %888 = vmatprep.subr.bf16.mxu0 0
  %889 = vmatpush2.bf16.xpose.msra.mxu0 0
  %890 = vmatprep.subr.bf16.mxu0 0
  %891 = vmatpush2.bf16.xpose.msra.mxu0 0
  %892 = vmatprep.subr.bf16.mxu0 0
  %893 = vmatpush2.bf16.xpose.msra.mxu0 0
  %894 = vmatprep.subr.bf16.mxu0 0
  %895 = vmatpush2.bf16.xpose.msra.mxu0 0
  %896 = vmatprep.subr.bf16.mxu0 0
  %897 = vmatpush2.bf16.xpose.msra.mxu0 0
  %898 = vmatprep.subr.bf16.mxu0 0
  %899 = vmatpush2.bf16.xpose.msra.mxu0 0
  %900 = vmatprep.subr.bf16.mxu0 0
  %901 = vmatpush2.bf16.xpose.msra.mxu0 0
  %902 = vmatprep.subr.bf16.mxu0 0
  %903 = vmatpush2.bf16.xpose.msra.mxu0 0
  %904 = vmatprep.mubr.bf16.mxu0 0
  %905 = vmatmul.mubr.bf16.gmra.mxu0 %v867
  %v906 = vpop.f32.mrf.mxu0
  %v907 = vadd.f32 0.0, %v906
  %v908 = vpop.f32.mrf.mxu0
  %v909 = vpop.f32.mrf.mxu0
  %v910 = vpop.f32.mrf.mxu0
  %911 = vdwg.mxu0
  %vm912 = vcmask 64512
  %913 = vst.msk [vmem:[%s3 + $0x10] sm:$0xff] %vm912, %v907
  %915 = vrot.lane.b32.xlu0 %v847, 96
  %v916 = vpop.permute.xlu0 %915
  %918 = vst.msk [vmem:[%s3 + $0x8] sm:$0xff] %vm861, %v916
  %v919 = vpack.c.bf16 %v850, %v850
  %v921 = vrot.slane %v776, 4
  %v923 = vsel %vm338, %v919, 0
  %v926 = vsel %vm338, %v921, 0
  %928 = vmatprep.subr.bf16.mxu0 0
  %929 = vmatpush1.bf16.xpose.msra.mxu0 0
  %930 = vmatprep.subr.bf16.mxu0 0
  %931 = vmatpush1.bf16.xpose.msra.mxu0 0
  %932 = vmatprep.subr.bf16.mxu0 0
  %933 = vmatpush1.bf16.xpose.msra.mxu0 0
  %934 = vmatprep.subr.bf16.mxu0 0
  %935 = vmatpush1.bf16.xpose.msra.mxu0 0
  %936 = vmatprep.subr.bf16.mxu0 0
  %937 = vmatpush1.bf16.xpose.msra.mxu0 0
  %938 = vmatprep.subr.bf16.mxu0 0
  %939 = vmatpush1.bf16.xpose.msra.mxu0 0
  %940 = vmatprep.subr.bf16.mxu0 0
  %941 = vmatpush1.bf16.xpose.msra.mxu0 0
  %942 = vmatprep.subr.bf16.mxu0 0
  %943 = vmatpush1.bf16.xpose.msra.mxu0 %v926
  %944 = vmatprep.subr.bf16.mxu0 0
  %945 = vmatpush2.bf16.xpose.msra.mxu0 0
  %946 = vmatprep.subr.bf16.mxu0 0
  %947 = vmatpush2.bf16.xpose.msra.mxu0 0
  %948 = vmatprep.subr.bf16.mxu0 0
  %949 = vmatpush2.bf16.xpose.msra.mxu0 0
  %950 = vmatprep.subr.bf16.mxu0 0
  %951 = vmatpush2.bf16.xpose.msra.mxu0 0
  %952 = vmatprep.subr.bf16.mxu0 0
  %953 = vmatpush2.bf16.xpose.msra.mxu0 0
  %954 = vmatprep.subr.bf16.mxu0 0
  %955 = vmatpush2.bf16.xpose.msra.mxu0 0
  %956 = vmatprep.subr.bf16.mxu0 0
  %957 = vmatpush2.bf16.xpose.msra.mxu0 0
  %958 = vmatprep.subr.bf16.mxu0 0
  %959 = vmatpush2.bf16.xpose.msra.mxu0 0
  %960 = vmatprep.mubr.bf16.mxu0 0
  %961 = vmatmul.mubr.bf16.gmra.mxu0 %v923
  %v962 = vpop.f32.mrf.mxu0
  %v963 = vadd.f32 0.0, %v962
  %v964 = vpop.f32.mrf.mxu0
  %v965 = vpop.f32.mrf.mxu0
  %v966 = vpop.f32.mrf.mxu0
  %967 = vdwg.mxu0
  %968 = vst.msk [vmem:[%s3 + $0x18] sm:$0xff] %vm912, %v963
  // Predicated region
  $region14: #{wlml_forward.1} parent=0 // pred_check
    _
  $region15: #{wlml_forward.1} parent=0 // pred_check_branch
    %970 = sbr.rel (0) target = $region17
  $region16: #{wlml_forward.1} parent=0 // pred_region
    _
  $region17: #{wlml_forward.1} parent=0 // pred_fallthru
    _
  // Predicated region
  $region18: #{wlml_forward.1} parent=0 // pred_check
    _
  $region19: #{wlml_forward.1} parent=0 // pred_check_branch
    %972 = sbr.rel (0) target = $region21
  $region20: #{wlml_forward.1} parent=0 // pred_region
    _
  $region21: #{wlml_forward.1} parent=0 // pred_fallthru
    _

</llo_original>
